<compile_context>
chip_gen: v7x
topology: tpu7x:2x2x1
jax: 0.10.0
libtpu: 0.0.40
codegen_flags: <defaults>
</compile_context>

<pallas_src>
import functools

import numpy as np
import jax
import jax.numpy as jnp
from jax.experimental import pallas as pl
from jax.experimental.pallas import tpu as pltpu

DIM = 3
K = 3 ** DIM            # 27 offsets of the 3x3x3 submanifold convolution
TILE_ROWS = 128         # active-site rows per grid step
VMEM_LIMIT = 32 * 1024 * 1024


def _conv1_kernel(x_ref, w1_ref, b1_ref, h1_ref, *, n_active, tile_rows):
    """h1 = relu(x @ (w1*g1) + b1); padding rows forced to zero (gather sentinel)."""
    h = jnp.dot(x_ref[...], w1_ref[...], preferred_element_type=jnp.float32)
    h = jnp.maximum(h + b1_ref[...], 0.0)
    row = pl.program_id(0) * tile_rows + jax.lax.broadcasted_iota(jnp.int32, h.shape, 0)
    h1_ref[...] = jnp.where(row < n_active, h, 0.0)


def _conv2_conv3_kernel(idx_ref, x_ref, h1_ref, w2_ref, b2_ref, w3_ref, b3_ref,
                        o_ref, g_ref, *, tile_rows, inner, n_offsets):
    """Rulebook gather + conv2 (one 27*inner contraction) + conv3 + residual + relu."""
    tile = pl.program_id(0)

    # Gather the 27 active-neighbour h1 rows of every output row of this tile into
    # g_ref[i, k*inner:(k+1)*inner].  idx sits in SMEM (scalar prefetch); h1 is fully
    # VMEM-resident, so the gather is VMEM->VMEM and the next tile's x/out DMAs overlap
    # via the BlockSpec pipeline.  Missing neighbours point at a guaranteed-zero row.
    def gather_row(i, carry):
        base = (tile * tile_rows + i) * n_offsets
        for k in range(n_offsets):                                  # static unroll (27)
            j = idx_ref[base + k]
            g_ref[pl.ds(i, 1), pl.ds(k * inner, inner)] = h1_ref[pl.ds(j, 1), :]
        return carry

    jax.lax.fori_loop(0, tile_rows, gather_row, 0)

    # conv2: single wide matmul (tile_rows, 27*inner) @ (27*inner, inner), bias + relu.
    h2 = jnp.dot(g_ref[...], w2_ref[...], preferred_element_type=jnp.float32)
    h2 = jnp.maximum(h2 + b2_ref[...], 0.0)
    # conv3 (folded affine), identity residual, final relu.
    h3 = jnp.dot(h2, w3_ref[...], preferred_element_type=jnp.float32) + b3_ref[...]
    # NOTE: cout=32 < 128 lanes -> masked stores; pad channels on-device to 128 only if
    # the store path ever dominates (it does not at these channel counts).
    o_ref[...] = jnp.maximum(h3 + x_ref[...], 0.0)


def sparse_bottleneck_forward(x_feat, rulebook, params, *, tile_rows=TILE_ROWS,
                              vmem_limit_bytes=VMEM_LIMIT):
    n, cin = x_feat.shape
    k_off, inner, _ = params["w2"].shape
    cout = params["w3"].shape[1]
    assert cin == cout, "identity residual requires inplanes == outplanes (downsample=None)"
    assert k_off == K

    # Pad rows so (a) the grid tiles evenly and (b) row `n` exists as a zero h1 row
    # (rulebook sentinel for missing neighbours).
    npad = pl.cdiv(n + 1, tile_rows) * tile_rows
    ntiles = npad // tile_rows

    # Fold the SparseAffineChannel3d scales into the conv weights (biases stay).
    w1p = (params["w1"] * params["g1"]).astype(jnp.float32)                       # (cin, inner)
    w2p = (params["w2"] * params["g2"]).reshape(K * inner, inner).astype(jnp.float32)
    w3p = (params["w3"] * params["g3"]).astype(jnp.float32)                       # (inner, cout)
    b1p, b2p, b3p = params["b1"], params["b2"], params["b3"]

    x_pad = jnp.zeros((npad, cin), jnp.float32).at[:n].set(x_feat)

    idx = jnp.asarray(rulebook, jnp.int32)                 # (n, K); -1 = no active neighbour
    idx = jnp.where(idx < 0, n, idx)                       # sentinel -> zero row of h1
    idx = jnp.pad(idx, ((0, npad - n), (0, 0)), constant_values=n).reshape(-1)    # (npad*K,)

    cparams = pltpu.CompilerParams(dimension_semantics=("parallel",),
                                   vmem_limit_bytes=vmem_limit_bytes)

    # ---- kernel A: conv1 (1x1x1 == per-site linear) + folded affine + relu ----------
    h1 = pl.pallas_call(
        functools.partial(_conv1_kernel, n_active=n, tile_rows=tile_rows),
        out_shape=jax.ShapeDtypeStruct((npad, inner), jnp.float32),
        grid=(ntiles,),
        in_specs=[pl.BlockSpec((tile_rows, cin), lambda t: (t, 0)),
                  pl.BlockSpec((cin, inner), lambda t: (0, 0)),
                  pl.BlockSpec((1, inner), lambda t: (0, 0))],
        out_specs=pl.BlockSpec((tile_rows, inner), lambda t: (t, 0)),
        compiler_params=cparams,
    )(x_pad, w1p, b1p)

    # ---- kernel B: rulebook gather + conv2 + conv3 + residual ------------------------
    grid_spec = pltpu.PrefetchScalarGridSpec(
        num_scalar_prefetch=1,                                   # rulebook -> SMEM
        grid=(ntiles,),
        in_specs=[pl.BlockSpec((tile_rows, cin), lambda t, idx_ref: (t, 0)),     # residual x
                  pl.BlockSpec((npad, inner), lambda t, idx_ref: (0, 0)),        # h1, resident
                  pl.BlockSpec((K * inner, inner), lambda t, idx_ref: (0, 0)),   # w2 (folded)
                  pl.BlockSpec((1, inner), lambda t, idx_ref: (0, 0)),
                  pl.BlockSpec((inner, cout), lambda t, idx_ref: (0, 0)),        # w3 (folded)
                  pl.BlockSpec((1, cout), lambda t, idx_ref: (0, 0))],
        out_specs=pl.BlockSpec((tile_rows, cout), lambda t, idx_ref: (t, 0)),
        scratch_shapes=[pltpu.VMEM((tile_rows, K * inner), jnp.float32)],
    )
    out = pl.pallas_call(
        functools.partial(_conv2_conv3_kernel, tile_rows=tile_rows, inner=inner,
                          n_offsets=K),
        out_shape=jax.ShapeDtypeStruct((npad, cout), jnp.float32),
        grid_spec=grid_spec,
        compiler_params=cparams,
    )(idx, x_pad, h1, w2p, b2p, w3p, b3p)

    return out[:n]


def build_rulebook(coords):
    """idx[i, k] = row of the active site at coords[i] + offset_k (same batch), else -1."""
    coords = np.asarray(coords)
    n = coords.shape[0]
    lut = {tuple(int(v) for v in c): i for i, c in enumerate(coords)}
    offsets = [(dz, dy, dx) for dz in (-1, 0, 1) for dy in (-1, 0, 1) for dx in (-1, 0, 1)]
    idx = np.full((n, K), -1, np.int32)
    for i, (b, z, y, x) in enumerate(coords):
        for k, (dz, dy, dx) in enumerate(offsets):
            j = lut.get((int(b), int(z) + dz, int(y) + dy, int(x) + dx))
            if j is not None:
                idx[i, k] = j
    return idx


def build_scatter_matrices(coords):
    """Dense S[k,i,j] = 1 iff site j sits at coords[i]+offset_k (reference check only)."""
    coords = np.asarray(coords)
    n = coords.shape[0]
    lut = {tuple(int(v) for v in c): i for i, c in enumerate(coords)}
    offsets = [(dz, dy, dx) for dz in (-1, 0, 1) for dy in (-1, 0, 1) for dx in (-1, 0, 1)]
    s = np.zeros((K, n, n), np.float32)
    for k, (dz, dy, dx) in enumerate(offsets):
        for i, (b, z, y, x) in enumerate(coords):
            j = lut.get((int(b), int(z) + dz, int(y) + dy, int(x) + dx))
            if j is not None:
                s[k, i, j] = 1.0
    return jnp.asarray(s)


def reference(x_feat, coords, p):
    """Plain-JAX mirror of the PyTorch module (unfolded params, dense scatter)."""
    s = build_scatter_matrices(coords)
    h1 = jnp.maximum((x_feat @ p["w1"]) * p["g1"] + p["b1"], 0.0)
    g = jnp.einsum("kij,jc->kic", s, h1)
    h2 = jnp.einsum("kic,kcd->id", g, p["w2"])
    h2 = jnp.maximum(h2 * p["g2"] + p["b2"], 0.0)
    h3 = (h2 @ p["w3"]) * p["g3"] + p["b3"]
    return jnp.maximum(h3 + x_feat, 0.0)


if __name__ == "__main__":
    # Module hyper-params (residual add requires inplanes == outplanes when downsample=None)
    inplanes, innerplanes, outplanes = 32, 16, 32
    batch, spatial, n_per_batch = 2, 8, 32

    key = jax.random.PRNGKey(0)
    k_coord, k_x, kw1, kg1, kw2, kg2, kw3, kg3 = jax.random.split(key, 8)

    # deterministic sparse active sites (unique per batch)
    coords_list = []
    for b in range(batch):
        kb = jax.random.fold_in(k_coord, b)
        flat = np.asarray(jax.random.choice(kb, spatial ** 3, (n_per_batch,), replace=False))
        zz, yy, xx = np.unravel_index(flat, (spatial, spatial, spatial))
        coords_list.append(np.stack([np.full(n_per_batch, b), zz, yy, xx], axis=1))
    coords = np.concatenate(coords_list, axis=0).astype(np.int32)        # (64, 4)
    n_active = coords.shape[0]

    rulebook = build_rulebook(coords)                                    # (64, 27) int32
    x_feat = jax.random.normal(k_x, (n_active, inplanes), jnp.float32)   # (64, 32)

    def winit(k, shape, fan):
        return jax.random.normal(k, shape, jnp.float32) / np.sqrt(fan)

    params = {
        # conv weights (no bias, as in the module)
        "w1": winit(kw1, (inplanes, innerplanes), inplanes),
        "w2": winit(kw2, (K, innerplanes, innerplanes), K * innerplanes),
        "w3": winit(kw3, (innerplanes, outplanes), innerplanes),
        # SparseAffineChannel3d: weight ~ U[0,1), bias = 0   (stored as (1, C) rows)
        "g1": jax.random.uniform(kg1, (1, innerplanes), jnp.float32),
        "b1": jnp.zeros((1, innerplanes), jnp.float32),
        "g2": jax.random.uniform(kg2, (1, innerplanes), jnp.float32),
        "b2": jnp.zeros((1, innerplanes), jnp.float32),
        "g3": jax.random.uniform(kg3, (1, outplanes), jnp.float32),
        "b3": jnp.zeros((1, outplanes), jnp.float32),
    }

    out = jax.block_until_ready(sparse_bottleneck_forward(x_feat, rulebook, params))
    ref = jax.block_until_ready(reference(x_feat, coords, params))
    np.testing.assert_allclose(np.asarray(out), np.asarray(ref), rtol=1e-3, atol=1e-3)

    print("KERNEL_OK")
</pallas_src>

<mosaic_0001>
module attributes {stable_mosaic.version = 11 : i64} {
  func.func @_conv1_kernel(%arg0: i32, %arg1: memref<128x32xf32, #tpu.memory_space<vmem>>, %arg2: memref<32x16xf32, #tpu.memory_space<vmem>>, %arg3: memref<1x16xf32, #tpu.memory_space<vmem>>, %arg4: memref<128x16xf32, #tpu.memory_space<vmem>>) attributes {dimension_semantics = [#tpu.dimension_semantics<parallel>], iteration_bounds = array<i64: 1>, scalar_prefetch = 0 : i64, scratch_operands = 0 : i64, tpu.core_type = #tpu.core_type<tc>, window_params = [{transform_indices = @transform_0, window_bounds = array<i64: 128, 32>}, {pipeline_mode = #tpu.pipeline_mode<synchronous>, transform_indices = @transform_1, window_bounds = array<i64: 32, 16>}, {pipeline_mode = #tpu.pipeline_mode<synchronous>, transform_indices = @transform_2, window_bounds = array<i64: 1, 16>}, {transform_indices = @transform_3, window_bounds = array<i64: 128, 16>}]} {
    %c0 = arith.constant 0 : index
    %c0_0 = arith.constant 0 : index
    %0 = vector.load %arg1[%c0, %c0_0] : memref<128x32xf32, #tpu.memory_space<vmem>>, vector<128x32xf32>
    %c0_1 = arith.constant 0 : index
    %c0_2 = arith.constant 0 : index
    %1 = vector.load %arg2[%c0_1, %c0_2] : memref<32x16xf32, #tpu.memory_space<vmem>>, vector<32x16xf32>
    %cst = arith.constant dense<0.000000e+00> : vector<128x16xf32>
    %2 = tpu.matmul %0, %1, %cst {dimension_numbers = #tpu.dot_dimension_numbers<[1], [0], [0], [1], [0, 0, 1, 1], [], []>} : vector<128x32xf32>, vector<32x16xf32>, vector<128x16xf32> -> vector<128x16xf32>
    %c0_3 = arith.constant 0 : index
    %c0_4 = arith.constant 0 : index
    %3 = vector.load %arg3[%c0_3, %c0_4] : memref<1x16xf32, #tpu.memory_space<vmem>>, vector<1x16xf32>
    %4 = vector.broadcast %3 : vector<1x16xf32> to vector<128x16xf32>
    %5 = arith.addf %2, %4 : vector<128x16xf32>
    %cst_5 = arith.constant 0.000000e+00 : f32
    %6 = vector.broadcast %cst_5 : f32 to vector<128x16xf32>
    %7 = arith.maximumf %5, %6 : vector<128x16xf32>
    %c128_i32 = arith.constant 128 : i32
    %8 = arith.muli %arg0, %c128_i32 : i32
    %9 = tpu.iota {dimensions = array<i32: 0>} : vector<128x16xi32>
    %10 = vector.broadcast %8 : i32 to vector<128x16xi32>
    %11 = arith.addi %10, %9 : vector<128x16xi32>
    %c64_i32 = arith.constant 64 : i32
    %12 = vector.broadcast %c64_i32 : i32 to vector<128x16xi32>
    %13 = arith.cmpi slt, %11, %12 : vector<128x16xi32>
    %cst_6 = arith.constant 0.000000e+00 : f32
    %14 = vector.broadcast %cst_6 : f32 to vector<128x16xf32>
    %15 = arith.select %13, %7, %14 : vector<128x16xi1>, vector<128x16xf32>
    %c0_7 = arith.constant 0 : index
    %c0_8 = arith.constant 0 : index
    %16 = vector.load %arg4[%c0_7, %c0_8] : memref<128x16xf32, #tpu.memory_space<vmem>>, vector<128x16xf32>
    tpu.vector_store %arg4[%c0_7, %c0_8], %15 {strides = array<i32>} : memref<128x16xf32, #tpu.memory_space<vmem>>, vector<128x16xf32>,
    return
  }
  func.func @transform_0(%arg0: i32) -> (i32, i32) {
    %c0_i32 = arith.constant 0 : i32
    %c0_i32_0 = arith.constant 0 : i32
    return %arg0, %c0_i32 : i32, i32
  }
  func.func @transform_1(%arg0: i32) -> (i32, i32) {
    %c0_i32 = arith.constant 0 : i32
    %c0_i32_0 = arith.constant 0 : i32
    %c0_i32_1 = arith.constant 0 : i32
    return %c0_i32, %c0_i32_0 : i32, i32
  }
  func.func @transform_2(%arg0: i32) -> (i32, i32) {
    %c0_i32 = arith.constant 0 : i32
    %c0_i32_0 = arith.constant 0 : i32
    %c0_i32_1 = arith.constant 0 : i32
    return %c0_i32, %c0_i32_0 : i32, i32
  }
  func.func @transform_3(%arg0: i32) -> (i32, i32) {
    %c0_i32 = arith.constant 0 : i32
    %c0_i32_0 = arith.constant 0 : i32
    return %arg0, %c0_i32 : i32, i32
  }
}

</mosaic_0001>

<llo_original>
// kernel: tpu_custom_call.1
$region0: #{tpu_custom_call.1}
  #allocation0 [shape = 'u32[]', space=smem, size = 0x4, offset = 0x4, fixed_abs, tag = 'smem constant byte address 0x4 - core index']
  #allocation1 [shape = 'u32[144,128]{1,0:T(1,128)}', space=vmem, size = 0x12000, scoped, tag = 'internal scratch']
  %s0 = inlined_call_operand.vmem [shape: f32[128,32], index: 0, kind: input, shape index: {}]
  %s1 = inlined_call_operand.vmem [shape: f32[32,16], index: 1, kind: input, shape index: {}]
  %s2 = inlined_call_operand.vmem [shape: f32[1,16], index: 2, kind: input, shape index: {}]
  %s3 = inlined_call_operand.vmem [shape: f32[128,16], index: 3, kind: output, shape index: {}]
  %s4 = sld [smem:[#allocation0]]
  $region22: #{tpu_custom_call.1} parent=0
    _
  %s6 = ssub.s32 1, %s4
  %s7 = scalar_select 0, %s6, %s4
  // Predicated region
  $region2: #{tpu_custom_call.1} parent=0 // pred_check
    _
  $region3: #{tpu_custom_call.1} parent=0 // pred_check_branch
    %9 = sbr.rel (0) target = $region5
  $region4: #{tpu_custom_call.1} parent=0 // pred_region
    _
  $region5: #{tpu_custom_call.1} parent=0 // pred_fallthru
    _
  // Predicated region
  $region6: #{tpu_custom_call.1} parent=0 // pred_check
    _
  $region7: #{tpu_custom_call.1} parent=0 // pred_check_branch
    %11 = sbr.rel (0) target = $region9
  $region8: #{tpu_custom_call.1} parent=0 // pred_region
    _
  $region9: #{tpu_custom_call.1} parent=0 // pred_fallthru
    _
  // Predicated region
  $region10: #{tpu_custom_call.1} parent=0 // pred_check
    _
  $region11: #{tpu_custom_call.1} parent=0 // pred_check_branch
    %13 = sbr.rel (0) target = $region13
  $region12: #{tpu_custom_call.1} parent=0 // pred_region
    _
  $region13: #{tpu_custom_call.1} parent=0 // pred_fallthru
    _
  %v14 = vld [vmem:[%s0] sm:$0xff]
  %v15 = vld [vmem:[%s0 + $0x8] sm:$0xff]
  %v16 = vld [vmem:[%s0 + $0x10] sm:$0xff]
  %v17 = vld [vmem:[%s0 + $0x18] sm:$0xff]
  %v18 = vld [vmem:[%s0 + $0x20] sm:$0xff]
  %v19 = vld [vmem:[%s0 + $0x28] sm:$0xff]
  %v20 = vld [vmem:[%s0 + $0x30] sm:$0xff]
  %v21 = vld [vmem:[%s0 + $0x38] sm:$0xff]
  %v22 = vld [vmem:[%s0 + $0x40] sm:$0xff]
  %v23 = vld [vmem:[%s0 + $0x48] sm:$0xff]
  %v24 = vld [vmem:[%s0 + $0x50] sm:$0xff]
  %v25 = vld [vmem:[%s0 + $0x58] sm:$0xff]
  %v26 = vld [vmem:[%s0 + $0x60] sm:$0xff]
  %v27 = vld [vmem:[%s0 + $0x68] sm:$0xff]
  %v28 = vld [vmem:[%s0 + $0x70] sm:$0xff]
  %v29 = vld [vmem:[%s0 + $0x78] sm:$0xff]
  %v30 = vld [vmem:[%s1] sm:$0xff]
  %v31 = vld [vmem:[%s1 + $0x8] sm:$0xff]
  %v32 = vld [vmem:[%s1 + $0x10] sm:$0xff]
  %v33 = vld [vmem:[%s1 + $0x18] sm:$0xff]
  %v34 = vld [vmem:[%s2] sm:$0x1]
  %v36 = vlaneseq
  %v37 = vshrl.u32 %v36, 7
  %v38 = vsub.s32 0, %v37
  %v39 = vrot.slane %v34, %v38
  %vm41 = vcmask 261120
  %v43 = vsel %vm41, %v14, 0
  %v46 = vsel %vm41, %v15, 0
  %v49 = vsel %vm41, %v16, 0
  %v52 = vsel %vm41, %v17, 0
  %v55 = vsel %vm41, %v18, 0
  %v58 = vsel %vm41, %v19, 0
  %v61 = vsel %vm41, %v20, 0
  %v64 = vsel %vm41, %v21, 0
  %v67 = vsel %vm41, %v22, 0
  %v70 = vsel %vm41, %v23, 0
  %v73 = vsel %vm41, %v24, 0
  %v76 = vsel %vm41, %v25, 0
  %v79 = vsel %vm41, %v26, 0
  %v82 = vsel %vm41, %v27, 0
  %v85 = vsel %vm41, %v28, 0
  %v88 = vsel %vm41, %v29, 0
  %90 = vmatprep.subr.mxu0 0.0
  %91 = vmatpush1.msra.mxu0 %v30
  %92 = vmatprep.subr.mxu0 0.0
  %93 = vmatpush1.msra.mxu0 %v31
  %94 = vmatprep.subr.mxu0 0.0
  %95 = vmatpush1.msra.mxu0 %v32
  %96 = vmatprep.subr.mxu0 0.0
  %97 = vmatpush1.msra.mxu0 %v33
  %98 = vmatprep.subr.mxu0 0.0
  %99 = vmatpush1.msra.mxu0 0.0
  %100 = vmatprep.subr.mxu0 0.0
  %101 = vmatpush1.msra.mxu0 0.0
  %102 = vmatprep.subr.mxu0 0.0
  %103 = vmatpush1.msra.mxu0 0.0
  %104 = vmatprep.subr.mxu0 0.0
  %105 = vmatpush1.msra.mxu0 0.0
  %106 = vmatprep.subr.mxu0 0.0
  %107 = vmatpush1.msra.mxu0 0.0
  %108 = vmatprep.subr.mxu0 0.0
  %109 = vmatpush1.msra.mxu0 0.0
  %110 = vmatprep.subr.mxu0 0.0
  %111 = vmatpush1.msra.mxu0 0.0
  %112 = vmatprep.subr.mxu0 0.0
  %113 = vmatpush1.msra.mxu0 0.0
  %114 = vmatprep.subr.mxu0 0.0
  %115 = vmatpush1.msra.mxu0 0.0
  %116 = vmatprep.subr.mxu0 0.0
  %117 = vmatpush1.msra.mxu0 0.0
  %118 = vmatprep.subr.mxu0 0.0
  %119 = vmatpush1.msra.mxu0 0.0
  %120 = vmatprep.subr.mxu0 0.0
  %121 = vmatpush1.msra.mxu0 0.0
  %122 = vmatprep.subr.mxu0 0.0
  %123 = vmatpush1.msra.mxu0 0.0
  %124 = vmatprep.subr.mxu0 0.0
  %125 = vmatpush1.msra.mxu0 0.0
  %126 = vmatprep.subr.mxu0 0.0
  %127 = vmatpush1.msra.mxu0 0.0
  %128 = vmatprep.subr.mxu0 0.0
  %129 = vmatpush1.msra.mxu0 0.0
  %130 = vmatprep.subr.mxu0 0.0
  %131 = vmatpush1.msra.mxu0 0.0
  %132 = vmatprep.subr.mxu0 0.0
  %133 = vmatpush1.msra.mxu0 0.0
  %134 = vmatprep.subr.mxu0 0.0
  %135 = vmatpush1.msra.mxu0 0.0
  %136 = vmatprep.subr.mxu0 0.0
  %137 = vmatpush1.msra.mxu0 0.0
  %138 = vmatprep.subr.mxu0 0.0
  %139 = vmatpush1.msra.mxu0 0.0
  %140 = vmatprep.subr.mxu0 0.0
  %141 = vmatpush1.msra.mxu0 0.0
  %142 = vmatprep.subr.mxu0 0.0
  %143 = vmatpush1.msra.mxu0 0.0
  %144 = vmatprep.subr.mxu0 0.0
  %145 = vmatpush1.msra.mxu0 0.0
  %146 = vmatprep.subr.mxu0 0.0
  %147 = vmatpush1.msra.mxu0 0.0
  %148 = vmatprep.subr.mxu0 0.0
  %149 = vmatpush1.msra.mxu0 0.0
  %150 = vmatprep.subr.mxu0 0.0
  %151 = vmatpush1.msra.mxu0 0.0
  %152 = vmatprep.subr.mxu0 0.0
  %153 = vmatpush1.msra.mxu0 0.0
  %154 = vmatprep.mubr.f32.mxu0 0.0
  %155 = vmatmul.mubr.f32.gmra.mrb[0].mxu0 %v43
  %v156 = vpop.f32.mrb[0].mxu0
  %v157 = vadd.f32 %v39, %v156
  %v158 = vpop.f32.mrb[0].mxu0
  %159 = vmatprep.mubr.f32.mxu0 0.0
  %160 = vmatmul.mubr.f32.gmra.mrb[0].mxu0 %v46
  %v161 = vpop.f32.mrb[0].mxu0
  %v162 = vadd.f32 %v39, %v161
  %v163 = vpop.f32.mrb[0].mxu0
  %164 = vmatprep.mubr.f32.mxu0 0.0
  %165 = vmatmul.mubr.f32.gmra.mrb[0].mxu0 %v49
  %v166 = vpop.f32.mrb[0].mxu0
  %v167 = vadd.f32 %v39, %v166
  %v168 = vpop.f32.mrb[0].mxu0
  %169 = vmatprep.mubr.f32.mxu0 0.0
  %170 = vmatmul.mubr.f32.gmra.mrb[0].mxu0 %v52
  %v171 = vpop.f32.mrb[0].mxu0
  %v172 = vadd.f32 %v39, %v171
  %v173 = vpop.f32.mrb[0].mxu0
  %174 = vmatprep.mubr.f32.mxu0 0.0
  %175 = vmatmul.mubr.f32.gmra.mrb[0].mxu0 %v55
  %v176 = vpop.f32.mrb[0].mxu0
  %v177 = vadd.f32 %v39, %v176
  %v178 = vpop.f32.mrb[0].mxu0
  %179 = vmatprep.mubr.f32.mxu0 0.0
  %180 = vmatmul.mubr.f32.gmra.mrb[0].mxu0 %v58
  %v181 = vpop.f32.mrb[0].mxu0
  %v182 = vadd.f32 %v39, %v181
  %v183 = vpop.f32.mrb[0].mxu0
  %184 = vmatprep.mubr.f32.mxu0 0.0
  %185 = vmatmul.mubr.f32.gmra.mrb[0].mxu0 %v61
  %v186 = vpop.f32.mrb[0].mxu0
  %v187 = vadd.f32 %v39, %v186
  %v188 = vpop.f32.mrb[0].mxu0
  %189 = vmatprep.mubr.f32.mxu0 0.0
  %190 = vmatmul.mubr.f32.gmra.mrb[0].mxu0 %v64
  %v191 = vpop.f32.mrb[0].mxu0
  %v192 = vadd.f32 %v39, %v191
  %v193 = vpop.f32.mrb[0].mxu0
  %194 = vmatprep.mubr.f32.mxu0 0.0
  %195 = vmatmul.mubr.f32.gmra.mrb[0].mxu0 %v67
  %v196 = vpop.f32.mrb[0].mxu0
  %v197 = vadd.f32 %v39, %v196
  %v198 = vpop.f32.mrb[0].mxu0
  %199 = vmatprep.mubr.f32.mxu0 0.0
  %200 = vmatmul.mubr.f32.gmra.mrb[0].mxu0 %v70
  %v201 = vpop.f32.mrb[0].mxu0
  %v202 = vadd.f32 %v39, %v201
  %v203 = vpop.f32.mrb[0].mxu0
  %204 = vmatprep.mubr.f32.mxu0 0.0
  %205 = vmatmul.mubr.f32.gmra.mrb[0].mxu0 %v73
  %v206 = vpop.f32.mrb[0].mxu0
  %v207 = vadd.f32 %v39, %v206
  %v208 = vpop.f32.mrb[0].mxu0
  %209 = vmatprep.mubr.f32.mxu0 0.0
  %210 = vmatmul.mubr.f32.gmra.mrb[0].mxu0 %v76
  %v211 = vpop.f32.mrb[0].mxu0
  %v212 = vadd.f32 %v39, %v211
  %v213 = vpop.f32.mrb[0].mxu0
  %214 = vmatprep.mubr.f32.mxu0 0.0
  %215 = vmatmul.mubr.f32.gmra.mrb[0].mxu0 %v79
  %v216 = vpop.f32.mrb[0].mxu0
  %v217 = vadd.f32 %v39, %v216
  %v218 = vpop.f32.mrb[0].mxu0
  %219 = vmatprep.mubr.f32.mxu0 0.0
  %220 = vmatmul.mubr.f32.gmra.mrb[0].mxu0 %v82
  %v221 = vpop.f32.mrb[0].mxu0
  %v222 = vadd.f32 %v39, %v221
  %v223 = vpop.f32.mrb[0].mxu0
  %224 = vmatprep.mubr.f32.mxu0 0.0
  %225 = vmatmul.mubr.f32.gmra.mrb[0].mxu0 %v85
  %v226 = vpop.f32.mrb[0].mxu0
  %v227 = vadd.f32 %v39, %v226
  %v228 = vpop.f32.mrb[0].mxu0
  %229 = vmatprep.mubr.f32.mxu0 0.0
  %230 = vmatmul.mubr.f32.gmra.mrb[0].mxu0 %v88
  %v231 = vpop.f32.mrb[0].mxu0
  %v232 = vadd.f32 %v39, %v231
  %v233 = vpop.f32.mrb[0].mxu0
  %234 = vdwg.mxu0
  %v235 = vmax.f32 %v157, 0.0
  %v236 = vmax.f32 %v162, 0.0
  %v237 = vmax.f32 %v167, 0.0
  %v238 = vmax.f32 %v172, 0.0
  %v239 = vmax.f32 %v177, 0.0
  %v240 = vmax.f32 %v182, 0.0
  %v241 = vmax.f32 %v187, 0.0
  %v242 = vmax.f32 %v192, 0.0
  %v243 = vmax.f32 %v197, 0.0
  %v244 = vmax.f32 %v202, 0.0
  %v245 = vmax.f32 %v207, 0.0
  %v246 = vmax.f32 %v212, 0.0
  %v247 = vmax.f32 %v217, 0.0
  %v248 = vmax.f32 %v222, 0.0
  %v249 = vmax.f32 %v227, 0.0
  %v250 = vmax.f32 %v232, 0.0
  %s251 = smul.u32 0, 128
  %v252 = vlaneseq
  %v253 = vshrl.u32 %v252, 7
  %v254 = vadd.s32 %v253, 8
  %v255 = vadd.s32 %v253, 16
  %v256 = vadd.s32 %v253, 24
  %v257 = vadd.s32 %v253, 32
  %v258 = vadd.s32 %v253, 40
  %v259 = vadd.s32 %v253, 48
  %v260 = vadd.s32 %v253, 56
  %v261 = vadd.s32 %v253, 64
  %v262 = vadd.s32 %v253, 72
  %v263 = vadd.s32 %v253, 80
  %v264 = vadd.s32 %v253, 88
  %v265 = vadd.s32 %v253, 96
  %v266 = vadd.s32 %v253, 104
  %v267 = vadd.s32 %v253, 112
  %v268 = vadd.s32 %v253, 120
  %v269 = vstv %s251
  %v270 = vadd.s32 %v269, %v253
  %v271 = vadd.s32 %v269, %v254
  %v272 = vadd.s32 %v269, %v255
  %v273 = vadd.s32 %v269, %v256
  %v274 = vadd.s32 %v269, %v257
  %v275 = vadd.s32 %v269, %v258
  %v276 = vadd.s32 %v269, %v259
  %v277 = vadd.s32 %v269, %v260
  %v278 = vadd.s32 %v269, %v261
  %v279 = vadd.s32 %v269, %v262
  %v280 = vadd.s32 %v269, %v263
  %v281 = vadd.s32 %v269, %v264
  %v282 = vadd.s32 %v269, %v265
  %v283 = vadd.s32 %v269, %v266
  %v284 = vadd.s32 %v269, %v267
  %v285 = vadd.s32 %v269, %v268
  %vm286 = vcmp.lt.s32.totalorder %v270, 64
  %vm287 = vcmp.lt.s32.totalorder %v271, 64
  %vm288 = vcmp.lt.s32.totalorder %v272, 64
  %vm289 = vcmp.lt.s32.totalorder %v273, 64
  %vm290 = vcmp.lt.s32.totalorder %v274, 64
  %vm291 = vcmp.lt.s32.totalorder %v275, 64
  %vm292 = vcmp.lt.s32.totalorder %v276, 64
  %vm293 = vcmp.lt.s32.totalorder %v277, 64
  %vm294 = vcmp.lt.s32.totalorder %v278, 64
  %vm295 = vcmp.lt.s32.totalorder %v279, 64
  %vm296 = vcmp.lt.s32.totalorder %v280, 64
  %vm297 = vcmp.lt.s32.totalorder %v281, 64
  %vm298 = vcmp.lt.s32.totalorder %v282, 64
  %vm299 = vcmp.lt.s32.totalorder %v283, 64
  %vm300 = vcmp.lt.s32.totalorder %v284, 64
  %vm301 = vcmp.lt.s32.totalorder %v285, 64
  %v302 = vsel %vm286, %v235, 0.0
  %v303 = vsel %vm287, %v236, 0.0
  %v304 = vsel %vm288, %v237, 0.0
  %v305 = vsel %vm289, %v238, 0.0
  %v306 = vsel %vm290, %v239, 0.0
  %v307 = vsel %vm291, %v240, 0.0
  %v308 = vsel %vm292, %v241, 0.0
  %v309 = vsel %vm293, %v242, 0.0
  %v310 = vsel %vm294, %v243, 0.0
  %v311 = vsel %vm295, %v244, 0.0
  %v312 = vsel %vm296, %v245, 0.0
  %v313 = vsel %vm297, %v246, 0.0
  %v314 = vsel %vm298, %v247, 0.0
  %v315 = vsel %vm299, %v248, 0.0
  %v316 = vsel %vm300, %v249, 0.0
  %v317 = vsel %vm301, %v250, 0.0
  %vm318 = vcmask 130048
  %319 = vst.msk [vmem:[%s3] sm:$0xff] %vm318, %v302
  %320 = vst.msk [vmem:[%s3 + $0x8] sm:$0xff] %vm318, %v303
  %321 = vst.msk [vmem:[%s3 + $0x10] sm:$0xff] %vm318, %v304
  %322 = vst.msk [vmem:[%s3 + $0x18] sm:$0xff] %vm318, %v305
  %323 = vst.msk [vmem:[%s3 + $0x20] sm:$0xff] %vm318, %v306
  %324 = vst.msk [vmem:[%s3 + $0x28] sm:$0xff] %vm318, %v307
  %325 = vst.msk [vmem:[%s3 + $0x30] sm:$0xff] %vm318, %v308
  %326 = vst.msk [vmem:[%s3 + $0x38] sm:$0xff] %vm318, %v309
  %327 = vst.msk [vmem:[%s3 + $0x40] sm:$0xff] %vm318, %v310
  %328 = vst.msk [vmem:[%s3 + $0x48] sm:$0xff] %vm318, %v311
  %329 = vst.msk [vmem:[%s3 + $0x50] sm:$0xff] %vm318, %v312
  %330 = vst.msk [vmem:[%s3 + $0x58] sm:$0xff] %vm318, %v313
  %331 = vst.msk [vmem:[%s3 + $0x60] sm:$0xff] %vm318, %v314
  %332 = vst.msk [vmem:[%s3 + $0x68] sm:$0xff] %vm318, %v315
  %333 = vst.msk [vmem:[%s3 + $0x70] sm:$0xff] %vm318, %v316
  %334 = vst.msk [vmem:[%s3 + $0x78] sm:$0xff] %vm318, %v317
  // Predicated region
  $region14: #{tpu_custom_call.1} parent=0 // pred_check
    _
  $region15: #{tpu_custom_call.1} parent=0 // pred_check_branch
    %336 = sbr.rel (0) target = $region17
  $region16: #{tpu_custom_call.1} parent=0 // pred_region
    _
  $region17: #{tpu_custom_call.1} parent=0 // pred_fallthru
    _
  // Predicated region
  $region18: #{tpu_custom_call.1} parent=0 // pred_check
    _
  $region19: #{tpu_custom_call.1} parent=0 // pred_check_branch
    %338 = sbr.rel (0) target = $region21
  $region20: #{tpu_custom_call.1} parent=0 // pred_region
    _
  $region21: #{tpu_custom_call.1} parent=0 // pred_fallthru
    _

</llo_original>
